<compile_context>
chip_gen: v7x
topology: tpu7x:2x2x1
jax: 0.10.0
libtpu: 0.0.40
codegen_flags: <defaults>
</compile_context>

<pallas_src>
import functools

import jax
import jax.numpy as jnp
from jax import lax
from jax.experimental import pallas as pl
from jax.experimental.pallas import tpu as pltpu

LANE = 128  # TPU lane width


def _pad_to(x, shape):
    """Zero-pad `x` up to `shape` (no-op if already that shape)."""
    if tuple(x.shape) == tuple(shape):
        return x
    out = jnp.zeros(shape, x.dtype)
    return out.at[tuple(slice(0, s) for s in x.shape)].set(x)


def _round_up(n, m):
    return max(m, -(-n // m) * m)


def prepare_actor_params(params, compute_dtype=jnp.bfloat16):
    """One-time prep (do this at init, NOT per forward call):
    - transpose PyTorch (out, in) weights to (in, out),
    - fuse the mu/sigma heads into one (fc2, 2*act) weight / (1, 2*act) bias,
    - zero-pad the hidden and head dims to the 128-lane width,
    - cast weights to bf16 (biases stay f32; they add into f32 accumulators).
    Zero padding keeps the math exact: padded columns/rows contribute 0."""
    fc1_w, fc1_b = params["fc1"]      # (fc1, in), (fc1,)
    fc2_w, fc2_b = params["fc2"]      # (fc2, fc1), (fc2,)
    mu_w, mu_b = params["mu"]         # (act, fc2), (act,)
    sg_w, sg_b = params["sigma"]      # (act, fc2), (act,)

    in_dim = fc1_w.shape[1]
    fc1_p = _round_up(fc1_w.shape[0], LANE)
    fc2_p = _round_up(fc2_w.shape[0], LANE)
    act = mu_w.shape[0]
    head_p = _round_up(2 * act, LANE)

    w1 = _pad_to(fc1_w.T, (in_dim, fc1_p)).astype(compute_dtype)
    b1 = _pad_to(fc1_b[None, :], (1, fc1_p)).astype(jnp.float32)
    w2 = _pad_to(fc2_w.T, (fc1_p, fc2_p)).astype(compute_dtype)
    b2 = _pad_to(fc2_b[None, :], (1, fc2_p)).astype(jnp.float32)

    w_head = jnp.concatenate([mu_w.T, sg_w.T], axis=1)       # (fc2, 2*act)
    b_head = jnp.concatenate([mu_b, sg_b])[None, :]          # (1,   2*act)
    wh = _pad_to(w_head, (fc2_p, head_p)).astype(compute_dtype)
    bh = _pad_to(b_head, (1, head_p)).astype(jnp.float32)

    return {"w1": w1, "b1": b1, "w2": w2, "b2": b2, "wh": wh, "bh": bh,
            "act": act, "in_dim": in_dim}


def actor_kernel(action_dims, reparam_noise,
                 x_ref, w1_ref, b1_ref, w2_ref, b2_ref, wh_ref, bh_ref,
                 out_ref):
    compute_dtype = w1_ref.dtype
    x = x_ref[...].astype(compute_dtype)

    # fc1 + ReLU (bf16 operands, f32 MXU accumulate)
    h1 = jnp.dot(x, w1_ref[...], preferred_element_type=jnp.float32) + b1_ref[...]
    h1 = jnp.maximum(h1, 0.0).astype(compute_dtype)

    # fc2 + ReLU
    h2 = jnp.dot(h1, w2_ref[...], preferred_element_type=jnp.float32) + b2_ref[...]
    h2 = jnp.maximum(h2, 0.0).astype(compute_dtype)

    # Fused mu||sigma head: one matmul, one lane-dense store.
    head = jnp.dot(h2, wh_ref[...], preferred_element_type=jnp.float32) + bh_ref[...]

    # clamp only the sigma columns [act, 2*act); mean columns pass through.
    col = lax.broadcasted_iota(jnp.int32, head.shape, 1)
    is_sigma = (col >= action_dims) & (col < 2 * action_dims)
    out_ref[...] = jnp.where(is_sigma,
                             jnp.clip(head, reparam_noise, 1.0),
                             head).astype(out_ref.dtype)


def actor_forward(state, prep, *, batch_tile=256, reparam_noise=1e-6):
    """state: [B, in_dim] float32; prep: output of prepare_actor_params."""
    B, in_dim = state.shape
    act = prep["act"]
    fc1_p = prep["w1"].shape[1]
    fc2_p = prep["w2"].shape[1]
    head_p = prep["wh"].shape[1]

    # Batch tile: multiple of 8 when tiling, or the full (small) batch.
    tb = min(batch_tile, B)
    grid = (pl.cdiv(B, tb),)

    flops = 2 * B * (in_dim * fc1_p + fc1_p * fc2_p + fc2_p * head_p)
    bytes_accessed = (
        state.size * state.dtype.itemsize
        + sum(prep[k].size * prep[k].dtype.itemsize
              for k in ("w1", "b1", "w2", "b2", "wh", "bh"))
        + B * head_p * 4)

    def weight_spec(shape):
        # Weights/biases stay VMEM-resident across all batch tiles.
        return pl.BlockSpec(shape, lambda i: (0, 0))

    fused = pl.pallas_call(
        functools.partial(actor_kernel, act, reparam_noise),
        out_shape=jax.ShapeDtypeStruct((B, head_p), jnp.float32),
        grid=grid,
        in_specs=[
            pl.BlockSpec((tb, in_dim), lambda i: (i, 0)),   # state tile
            weight_spec((in_dim, fc1_p)),                   # w1
            weight_spec((1, fc1_p)),                        # b1
            weight_spec((fc1_p, fc2_p)),                    # w2
            weight_spec((1, fc2_p)),                        # b2
            weight_spec((fc2_p, head_p)),                   # w_head (mu || sigma)
            weight_spec((1, head_p)),                       # b_head
        ],
        out_specs=pl.BlockSpec((tb, head_p), lambda i: (i, 0)),
        compiler_params=pltpu.CompilerParams(
            dimension_semantics=("parallel",)),             # v7x: shard batch over 2 TCs
        cost_estimate=pl.CostEstimate(
            flops=flops, transcendentals=0, bytes_accessed=bytes_accessed),
    )(state, prep["w1"], prep["b1"], prep["w2"], prep["b2"],
      prep["wh"], prep["bh"])

    mean = fused[:, :act]
    std = fused[:, act:2 * act]
    return mean, std


def init_linear(key, in_dim, out_dim):
    # PyTorch nn.Linear default init: U(-1/sqrt(fan_in), 1/sqrt(fan_in))
    kw, kb = jax.random.split(key)
    bound = 1.0 / jnp.sqrt(jnp.float32(in_dim))
    w = jax.random.uniform(kw, (out_dim, in_dim), jnp.float32, -bound, bound)
    b = jax.random.uniform(kb, (out_dim,), jnp.float32, -bound, bound)
    return w, b


if __name__ == "__main__":
    # Small shapes consistent with the module:
    #   input_dims=(16,), fc1_dims=32, fc2_dims=32, action_dims=4, batch=2
    B, IN, FC1, FC2, ACT = 2, 16, 32, 32, 4

    key = jax.random.PRNGKey(0)
    k_state, k1, k2, k3, k4 = jax.random.split(key, 5)

    params = {
        "fc1": init_linear(k1, IN, FC1),
        "fc2": init_linear(k2, FC1, FC2),
        "mu": init_linear(k3, FC2, ACT),
        "sigma": init_linear(k4, FC2, ACT),
    }
    state = jax.random.normal(k_state, (B, IN), jnp.float32)

    prep = prepare_actor_params(params)      # one-time prep (transpose/pad/fuse/cast)
    mean, std = actor_forward(state, prep)
    jax.block_until_ready((mean, std))
    assert mean.shape == (B, ACT) and std.shape == (B, ACT)

    # Reference 1: same bf16-operand / f32-accumulate numerics as the kernel.
    def ref_bf16(x, p, act):
        cd = jnp.bfloat16
        h1 = jnp.maximum(jnp.dot(x.astype(cd), p["w1"],
                                 preferred_element_type=jnp.float32) + p["b1"], 0.0).astype(cd)
        h2 = jnp.maximum(jnp.dot(h1, p["w2"],
                                 preferred_element_type=jnp.float32) + p["b2"], 0.0).astype(cd)
        head = jnp.dot(h2, p["wh"], preferred_element_type=jnp.float32) + p["bh"]
        return head[:, :act], jnp.clip(head[:, act:2 * act], 1e-6, 1.0)

    m_bf, s_bf = ref_bf16(state, prep, ACT)
    assert jnp.allclose(mean, m_bf, atol=1e-4, rtol=1e-4), "mean mismatch (bf16 ref)"
    assert jnp.allclose(std, s_bf, atol=1e-4, rtol=1e-4), "stddev mismatch (bf16 ref)"

    # Reference 2: the original f32 PyTorch-semantics forward (loose tolerance
    # because the kernel uses bf16 operands with f32 accumulation).
    def ref_f32(x, p):
        h = jnp.maximum(x @ p["fc1"][0].T + p["fc1"][1], 0.0)
        h = jnp.maximum(h @ p["fc2"][0].T + p["fc2"][1], 0.0)
        m = h @ p["mu"][0].T + p["mu"][1]
        s = jnp.clip(h @ p["sigma"][0].T + p["sigma"][1], 1e-6, 1.0)
        return m, s

    m_ref, s_ref = ref_f32(state, params)
    assert jnp.allclose(mean, m_ref, atol=5e-2, rtol=5e-2), "mean mismatch (f32 ref)"
    assert jnp.allclose(std, s_ref, atol=5e-2, rtol=5e-2), "stddev mismatch (f32 ref)"
    assert bool(jnp.all(std >= 1e-6)) and bool(jnp.all(std <= 1.0)), "clamp violated"

    # TODO(synk): sample_normal (Normal sampling, tanh squash, log-prob) and
    # optimizer/checkpoint I/O are outside forward() and not implemented here.
    print("KERNEL_OK")
</pallas_src>

<mosaic_0001>
module attributes {stable_mosaic.version = 11 : i64} {
  func.func @actor_kernel(%arg0: i32, %arg1: memref<2x16xf32, #tpu.memory_space<vmem>>, %arg2: memref<16x128xbf16, #tpu.memory_space<vmem>>, %arg3: memref<1x128xf32, #tpu.memory_space<vmem>>, %arg4: memref<128x128xbf16, #tpu.memory_space<vmem>>, %arg5: memref<1x128xf32, #tpu.memory_space<vmem>>, %arg6: memref<128x128xbf16, #tpu.memory_space<vmem>>, %arg7: memref<1x128xf32, #tpu.memory_space<vmem>>, %arg8: memref<2x128xf32, #tpu.memory_space<vmem>>) attributes {dimension_semantics = [#tpu.dimension_semantics<parallel>], iteration_bounds = array<i64: 1>, scalar_prefetch = 0 : i64, scratch_operands = 0 : i64, tpu.core_type = #tpu.core_type<tc>, window_params = [{transform_indices = @transform_0, window_bounds = array<i64: 2, 16>}, {pipeline_mode = #tpu.pipeline_mode<synchronous>, transform_indices = @transform_1, window_bounds = array<i64: 16, 128>}, {pipeline_mode = #tpu.pipeline_mode<synchronous>, transform_indices = @transform_2, window_bounds = array<i64: 1, 128>}, {pipeline_mode = #tpu.pipeline_mode<synchronous>, transform_indices = @transform_3, window_bounds = array<i64: 128, 128>}, {pipeline_mode = #tpu.pipeline_mode<synchronous>, transform_indices = @transform_4, window_bounds = array<i64: 1, 128>}, {pipeline_mode = #tpu.pipeline_mode<synchronous>, transform_indices = @transform_5, window_bounds = array<i64: 128, 128>}, {pipeline_mode = #tpu.pipeline_mode<synchronous>, transform_indices = @transform_6, window_bounds = array<i64: 1, 128>}, {transform_indices = @transform_7, window_bounds = array<i64: 2, 128>}]} {
    %c0 = arith.constant 0 : index
    %c0_0 = arith.constant 0 : index
    %0 = vector.load %arg1[%c0, %c0_0] : memref<2x16xf32, #tpu.memory_space<vmem>>, vector<2x16xf32>
    %1 = arith.truncf %0 : vector<2x16xf32> to vector<2x16xbf16>
    %c0_1 = arith.constant 0 : index
    %c0_2 = arith.constant 0 : index
    %2 = vector.load %arg2[%c0_1, %c0_2] : memref<16x128xbf16, #tpu.memory_space<vmem>>, vector<16x128xbf16>
    %cst = arith.constant dense<0.000000e+00> : vector<2x128xf32>
    %3 = tpu.matmul %1, %2, %cst {dimension_numbers = #tpu.dot_dimension_numbers<[1], [0], [0], [1], [0, 0, 1, 1], [], []>} : vector<2x16xbf16>, vector<16x128xbf16>, vector<2x128xf32> -> vector<2x128xf32>
    %c0_3 = arith.constant 0 : index
    %c0_4 = arith.constant 0 : index
    %4 = vector.load %arg3[%c0_3, %c0_4] : memref<1x128xf32, #tpu.memory_space<vmem>>, vector<1x128xf32>
    %5 = vector.broadcast %4 : vector<1x128xf32> to vector<2x128xf32>
    %6 = arith.addf %3, %5 : vector<2x128xf32>
    %cst_5 = arith.constant 0.000000e+00 : f32
    %7 = vector.broadcast %cst_5 : f32 to vector<2x128xf32>
    %8 = arith.maximumf %6, %7 : vector<2x128xf32>
    %9 = arith.truncf %8 : vector<2x128xf32> to vector<2x128xbf16>
    %c0_6 = arith.constant 0 : index
    %c0_7 = arith.constant 0 : index
    %10 = vector.load %arg4[%c0_6, %c0_7] : memref<128x128xbf16, #tpu.memory_space<vmem>>, vector<128x128xbf16>
    %cst_8 = arith.constant dense<0.000000e+00> : vector<2x128xf32>
    %11 = tpu.matmul %9, %10, %cst_8 {dimension_numbers = #tpu.dot_dimension_numbers<[1], [0], [0], [1], [0, 0, 1, 1], [], []>} : vector<2x128xbf16>, vector<128x128xbf16>, vector<2x128xf32> -> vector<2x128xf32>
    %c0_9 = arith.constant 0 : index
    %c0_10 = arith.constant 0 : index
    %12 = vector.load %arg5[%c0_9, %c0_10] : memref<1x128xf32, #tpu.memory_space<vmem>>, vector<1x128xf32>
    %13 = vector.broadcast %12 : vector<1x128xf32> to vector<2x128xf32>
    %14 = arith.addf %11, %13 : vector<2x128xf32>
    %cst_11 = arith.constant 0.000000e+00 : f32
    %15 = vector.broadcast %cst_11 : f32 to vector<2x128xf32>
    %16 = arith.maximumf %14, %15 : vector<2x128xf32>
    %17 = arith.truncf %16 : vector<2x128xf32> to vector<2x128xbf16>
    %c0_12 = arith.constant 0 : index
    %c0_13 = arith.constant 0 : index
    %18 = vector.load %arg6[%c0_12, %c0_13] : memref<128x128xbf16, #tpu.memory_space<vmem>>, vector<128x128xbf16>
    %cst_14 = arith.constant dense<0.000000e+00> : vector<2x128xf32>
    %19 = tpu.matmul %17, %18, %cst_14 {dimension_numbers = #tpu.dot_dimension_numbers<[1], [0], [0], [1], [0, 0, 1, 1], [], []>} : vector<2x128xbf16>, vector<128x128xbf16>, vector<2x128xf32> -> vector<2x128xf32>
    %c0_15 = arith.constant 0 : index
    %c0_16 = arith.constant 0 : index
    %20 = vector.load %arg7[%c0_15, %c0_16] : memref<1x128xf32, #tpu.memory_space<vmem>>, vector<1x128xf32>
    %21 = vector.broadcast %20 : vector<1x128xf32> to vector<2x128xf32>
    %22 = arith.addf %19, %21 : vector<2x128xf32>
    %23 = tpu.iota {dimensions = array<i32: 1>} : vector<2x128xi32>
    %c4_i32 = arith.constant 4 : i32
    %24 = vector.broadcast %c4_i32 : i32 to vector<2x128xi32>
    %25 = arith.cmpi sge, %23, %24 : vector<2x128xi32>
    %c8_i32 = arith.constant 8 : i32
    %26 = vector.broadcast %c8_i32 : i32 to vector<2x128xi32>
    %27 = arith.cmpi slt, %23, %26 : vector<2x128xi32>
    %28 = arith.andi %25, %27 : vector<2x128xi1>
    %cst_17 = arith.constant 9.99999997E-7 : f32
    %cst_18 = arith.constant 1.000000e+00 : f32
    %29 = vector.broadcast %cst_17 : f32 to vector<2x128xf32>
    %30 = arith.maximumf %29, %22 : vector<2x128xf32>
    %31 = vector.broadcast %cst_18 : f32 to vector<2x128xf32>
    %32 = arith.minimumf %31, %30 : vector<2x128xf32>
    %33 = arith.select %28, %32, %22 : vector<2x128xi1>, vector<2x128xf32>
    %c0_19 = arith.constant 0 : index
    %c0_20 = arith.constant 0 : index
    %34 = vector.load %arg8[%c0_19, %c0_20] : memref<2x128xf32, #tpu.memory_space<vmem>>, vector<2x128xf32>
    tpu.vector_store %arg8[%c0_19, %c0_20], %33 {strides = array<i32>} : memref<2x128xf32, #tpu.memory_space<vmem>>, vector<2x128xf32>,
    return
  }
  func.func @transform_0(%arg0: i32) -> (i32, i32) {
    %c0_i32 = arith.constant 0 : i32
    %c0_i32_0 = arith.constant 0 : i32
    return %arg0, %c0_i32 : i32, i32
  }
  func.func @transform_1(%arg0: i32) -> (i32, i32) {
    %c0_i32 = arith.constant 0 : i32
    %c0_i32_0 = arith.constant 0 : i32
    %c0_i32_1 = arith.constant 0 : i32
    return %c0_i32, %c0_i32_0 : i32, i32
  }
  func.func @transform_2(%arg0: i32) -> (i32, i32) {
    %c0_i32 = arith.constant 0 : i32
    %c0_i32_0 = arith.constant 0 : i32
    %c0_i32_1 = arith.constant 0 : i32
    return %c0_i32, %c0_i32_0 : i32, i32
  }
  func.func @transform_3(%arg0: i32) -> (i32, i32) {
    %c0_i32 = arith.constant 0 : i32
    %c0_i32_0 = arith.constant 0 : i32
    %c0_i32_1 = arith.constant 0 : i32
    return %c0_i32, %c0_i32_0 : i32, i32
  }
  func.func @transform_4(%arg0: i32) -> (i32, i32) {
    %c0_i32 = arith.constant 0 : i32
    %c0_i32_0 = arith.constant 0 : i32
    %c0_i32_1 = arith.constant 0 : i32
    return %c0_i32, %c0_i32_0 : i32, i32
  }
  func.func @transform_5(%arg0: i32) -> (i32, i32) {
    %c0_i32 = arith.constant 0 : i32
    %c0_i32_0 = arith.constant 0 : i32
    %c0_i32_1 = arith.constant 0 : i32
    return %c0_i32, %c0_i32_0 : i32, i32
  }
  func.func @transform_6(%arg0: i32) -> (i32, i32) {
    %c0_i32 = arith.constant 0 : i32
    %c0_i32_0 = arith.constant 0 : i32
    %c0_i32_1 = arith.constant 0 : i32
    return %c0_i32, %c0_i32_0 : i32, i32
  }
  func.func @transform_7(%arg0: i32) -> (i32, i32) {
    %c0_i32 = arith.constant 0 : i32
    %c0_i32_0 = arith.constant 0 : i32
    return %arg0, %c0_i32 : i32, i32
  }
}

</mosaic_0001>

<llo_original>
// kernel: tpu_custom_call.1
$region0: #{tpu_custom_call.1}
  #allocation0 [shape = 'u32[]', space=smem, size = 0x4, offset = 0x4, fixed_abs, tag = 'smem constant byte address 0x4 - core index']
  #allocation1 [shape = 'u32[144,128]{1,0:T(1,128)}', space=vmem, size = 0x12000, scoped, tag = 'internal scratch']
  %s0 = inlined_call_operand.hbm [shape: f32[2,16], index: 0, kind: input, shape index: {}]
  %s1 = inlined_call_operand.hbm [shape: bf16[16,128], index: 1, kind: input, shape index: {}]
  %s2 = inlined_call_operand.vmem [shape: f32[1,128], index: 2, kind: input, shape index: {}]
  %s3 = inlined_call_operand.hbm [shape: bf16[128,128], index: 3, kind: input, shape index: {}]
  %s4 = inlined_call_operand.vmem [shape: f32[1,128], index: 4, kind: input, shape index: {}]
  %s5 = inlined_call_operand.hbm [shape: bf16[128,128], index: 5, kind: input, shape index: {}]
  %s6 = inlined_call_operand.vmem [shape: f32[1,128], index: 6, kind: input, shape index: {}]
  %s7 = inlined_call_operand.hbm [shape: f32[2,128], index: 7, kind: output, shape index: {}]
  %s8 = sld [smem:[#allocation0]]
  $region54: #{tpu_custom_call.1} parent=0
    _
  %s10 = ssub.s32 1, %s8
  %s11 = scalar_select 0, %s10, %s8
  $region1: #{tpu_custom_call.1} parent=0
    #allocation2 [shape = 'u8[1024]{0}', space=vmem, size = 0x400, scoped, tag = 'input window, operand 0, single buffered']
    #allocation3 [shape = 's32[1]{0}', space=sflag, size = 0x4, scoped, tag = 'scoped memory for tpu_custom_call.1']
    #allocation4 [shape = 's32[1]{0}', space=sflag, size = 0x4, scoped, tag = 'scoped memory for tpu_custom_call.1']
    #allocation5 [shape = 'u8[4096]{0}', space=vmem, size = 0x1000, scoped, tag = 'input window, operand 1, single buffered']
    #allocation6 [shape = 's32[1]{0}', space=sflag, size = 0x4, scoped, tag = 'scoped memory for tpu_custom_call.1']
    #allocation7 [shape = 'u8[32768]{0}', space=vmem, size = 0x8000, scoped, tag = 'input window, operand 3, single buffered']
    #allocation8 [shape = 'u8[32768]{0}', space=vmem, size = 0x8000, scoped, tag = 'input window, operand 5, single buffered']
    #allocation9 [shape = 's32[1]{0}', space=sflag, size = 0x4, scoped, tag = 'scoped memory for tpu_custom_call.1']
    #allocation10 [shape = 'u8[1024]{0}', space=vmem, size = 0x400, scoped, tag = 'output window, operand 0, single buffered']
    %12 = vsyncpa [#allocation3], 0
    %13 = vsyncpa [#allocation6], 0
    %14 = vsyncpa [#allocation9], 0
    %15 = vsyncpa [#allocation4], 0
    // Predicated region
    $region2: #{tpu_custom_call.1} parent=1 // pred_check
      _
    $region3: #{tpu_custom_call.1} parent=1 // pred_check_branch
      %17 = sbr.rel (0) target = $region5
    $region4: #{tpu_custom_call.1} parent=1 // pred_region
      %s19 = ssub.s32 32, 32
      %20 = vsyncadd [#allocation3], %s19
      %s22 = sshll.u32 [#allocation2], 4
      %s23 = int_to_ptr.vmem [resolvable:$true] %s22
      %25 = dma.hbm_to_vmem [thread:$0]  %s0, 32, %s23, [#allocation3]
    $region5: #{tpu_custom_call.1} parent=1 // pred_fallthru
      _
    // Predicated region
    $region6: #{tpu_custom_call.1} parent=1 // pred_check
      _
    $region7: #{tpu_custom_call.1} parent=1 // pred_check_branch
      %27 = sbr.rel (0) target = $region9
    $region8: #{tpu_custom_call.1} parent=1 // pred_region
      %s29 = ssub.s32 128, 128
      %30 = vsyncadd [#allocation6], %s29
      %s31 = sshll.u32 [#allocation5], 4
      %s32 = int_to_ptr.vmem [resolvable:$true] %s31
      %37 = dma.hbm_to_vmem [thread:$0]  %s1, 128, %s32, [#allocation6], 64, 64, 4
    $region9: #{tpu_custom_call.1} parent=1 // pred_fallthru
      _
    // Predicated region
    $region10: #{tpu_custom_call.1} parent=1 // pred_check
      _
    $region11: #{tpu_custom_call.1} parent=1 // pred_check_branch
      %39 = sbr.rel (0) target = $region13
    $region12: #{tpu_custom_call.1} parent=1 // pred_region
      _
    $region13: #{tpu_custom_call.1} parent=1 // pred_fallthru
      _
    // Predicated region
    $region14: #{tpu_custom_call.1} parent=1 // pred_check
      _
    $region15: #{tpu_custom_call.1} parent=1 // pred_check_branch
      %41 = sbr.rel (0) target = $region17
    $region16: #{tpu_custom_call.1} parent=1 // pred_region
      %s43 = ssub.s32 1024, 1024
      %44 = vsyncadd [#allocation6], %s43
      %s45 = sshll.u32 [#allocation7], 4
      %s46 = int_to_ptr.vmem [resolvable:$true] %s45
      %51 = dma.hbm_to_vmem [thread:$0]  %s3, 1024, %s46, [#allocation6], 64, 64, 4
    $region17: #{tpu_custom_call.1} parent=1 // pred_fallthru
      _
    // Predicated region
    $region18: #{tpu_custom_call.1} parent=1 // pred_check
      _
    $region19: #{tpu_custom_call.1} parent=1 // pred_check_branch
      %53 = sbr.rel (0) target = $region21
    $region20: #{tpu_custom_call.1} parent=1 // pred_region
      _
    $region21: #{tpu_custom_call.1} parent=1 // pred_fallthru
      _
    // Predicated region
    $region22: #{tpu_custom_call.1} parent=1 // pred_check
      _
    $region23: #{tpu_custom_call.1} parent=1 // pred_check_branch
      %55 = sbr.rel (0) target = $region25
    $region24: #{tpu_custom_call.1} parent=1 // pred_region
      %s57 = ssub.s32 1024, 1024
      %58 = vsyncadd [#allocation9], %s57
      %s59 = sshll.u32 [#allocation8], 4
      %s60 = int_to_ptr.vmem [resolvable:$true] %s59
      %65 = dma.hbm_to_vmem [thread:$0]  %s5, 1024, %s60, [#allocation9], 64, 64, 4
    $region25: #{tpu_custom_call.1} parent=1 // pred_fallthru
      _
    // Predicated region
    $region26: #{tpu_custom_call.1} parent=1 // pred_check
      _
    $region27: #{tpu_custom_call.1} parent=1 // pred_check_branch
      %67 = sbr.rel (0) target = $region29
    $region28: #{tpu_custom_call.1} parent=1 // pred_region
      _
    $region29: #{tpu_custom_call.1} parent=1 // pred_fallthru
      _
    // Predicated region
    $region30: #{tpu_custom_call.1} parent=1 // pred_check
      _
    $region31: #{tpu_custom_call.1} parent=1 // pred_check_branch
      %69 = sbr.rel (0) target = $region33
    $region32: #{tpu_custom_call.1} parent=1 // pred_region
      %70 = dma.done [#allocation3], 32
    $region33: #{tpu_custom_call.1} parent=1 // pred_fallthru
      _
    // Predicated region
    $region34: #{tpu_custom_call.1} parent=1 // pred_check
      _
    $region35: #{tpu_custom_call.1} parent=1 // pred_check_branch
      %72 = sbr.rel (0) target = $region37
    $region36: #{tpu_custom_call.1} parent=1 // pred_region
      %73 = dma.done [#allocation6], 128
    $region37: #{tpu_custom_call.1} parent=1 // pred_fallthru
      _
    // Predicated region
    $region38: #{tpu_custom_call.1} parent=1 // pred_check
      _
    $region39: #{tpu_custom_call.1} parent=1 // pred_check_branch
      %75 = sbr.rel (0) target = $region41
    $region40: #{tpu_custom_call.1} parent=1 // pred_region
      %76 = dma.done [#allocation6], 1024
    $region41: #{tpu_custom_call.1} parent=1 // pred_fallthru
      _
    // Predicated region
    $region42: #{tpu_custom_call.1} parent=1 // pred_check
      _
    $region43: #{tpu_custom_call.1} parent=1 // pred_check_branch
      %78 = sbr.rel (0) target = $region45
    $region44: #{tpu_custom_call.1} parent=1 // pred_region
      %79 = dma.done [#allocation9], 1024
    $region45: #{tpu_custom_call.1} parent=1 // pred_fallthru
      _
    %v81 = vld [vmem:[#allocation2] sm:$0x3]
    %v82 = vpack.c.bf16 %v81, %v81
    %v83 = vld [vmem:[#allocation5] sm:$0xf]
    %v84 = vld [vmem:[#allocation5 + $0x4] sm:$0xf]
    %v85 = vld [vmem:[%s2] sm:$0x1]
    %v87 = vlaneseq
    %v88 = vshrl.u32 %v87, 7
    %v89 = vsub.s32 0, %v88
    %v90 = vrot.slane %v85, %v89
    %v94 = vunpack.c.l.b16 %v83
    %v95 = vunpack.c.l.b16 %v84
    %v96 = vpack.c.b16 %v95, %v94
    %vm98 = vcmask 130048
    %v100 = vsel %vm98, %v82, 0
    %102 = vmatprep.subr.bf16.mxu0 0
    %103 = vmatpush1.bf16.msra.mxu0 %v96
    %104 = vmatprep.subr.bf16.mxu0 0
    %105 = vmatpush1.bf16.msra.mxu0 0
    %106 = vmatprep.subr.bf16.mxu0 0
    %107 = vmatpush1.bf16.msra.mxu0 0
    %108 = vmatprep.subr.bf16.mxu0 0
    %109 = vmatpush1.bf16.msra.mxu0 0
    %110 = vmatprep.subr.bf16.mxu0 0
    %111 = vmatpush1.bf16.msra.mxu0 0
    %112 = vmatprep.subr.bf16.mxu0 0
    %113 = vmatpush1.bf16.msra.mxu0 0
    %114 = vmatprep.subr.bf16.mxu0 0
    %115 = vmatpush1.bf16.msra.mxu0 0
    %116 = vmatprep.subr.bf16.mxu0 0
    %117 = vmatpush1.bf16.msra.mxu0 0
    %118 = vmatprep.subr.bf16.mxu0 0
    %119 = vmatpush1.bf16.msra.mxu0 0
    %120 = vmatprep.subr.bf16.mxu0 0
    %121 = vmatpush1.bf16.msra.mxu0 0
    %122 = vmatprep.subr.bf16.mxu0 0
    %123 = vmatpush1.bf16.msra.mxu0 0
    %124 = vmatprep.subr.bf16.mxu0 0
    %125 = vmatpush1.bf16.msra.mxu0 0
    %126 = vmatprep.subr.bf16.mxu0 0
    %127 = vmatpush1.bf16.msra.mxu0 0
    %128 = vmatprep.subr.bf16.mxu0 0
    %129 = vmatpush1.bf16.msra.mxu0 0
    %130 = vmatprep.subr.bf16.mxu0 0
    %131 = vmatpush1.bf16.msra.mxu0 0
    %132 = vmatprep.subr.bf16.mxu0 0
    %133 = vmatpush1.bf16.msra.mxu0 0
    %134 = vmatprep.mubr.bf16.mxu0 0
    %135 = vmatmul.mubr.bf16.gmra.mrb[0].mxu0 %v100
    %v136 = vpop.f32.mrb[0].mxu0
    %v137 = vadd.f32 %v90, %v136
    %v138 = vpop.f32.mrb[0].mxu0
    %v139 = vpop.f32.mrb[0].mxu0
    %v140 = vpop.f32.mrb[0].mxu0
    %141 = vdwg.mxu0
    %v142 = vmax.f32 %v137, 0.0
    %v143 = vpack.c.bf16 %v142, %v142
    %v144 = vld [vmem:[#allocation7] sm:$0xf]
    %v145 = vld [vmem:[#allocation7 + $0x4] sm:$0xf]
    %v146 = vld [vmem:[#allocation7 + $0x8] sm:$0xf]
    %v147 = vld [vmem:[#allocation7 + $0xc] sm:$0xf]
    %v148 = vld [vmem:[#allocation7 + $0x10] sm:$0xf]
    %v149 = vld [vmem:[#allocation7 + $0x14] sm:$0xf]
    %v150 = vld [vmem:[#allocation7 + $0x18] sm:$0xf]
    %v151 = vld [vmem:[#allocation7 + $0x1c] sm:$0xf]
    %v152 = vld [vmem:[#allocation7 + $0x20] sm:$0xf]
    %v153 = vld [vmem:[#allocation7 + $0x24] sm:$0xf]
    %v154 = vld [vmem:[#allocation7 + $0x28] sm:$0xf]
    %v155 = vld [vmem:[#allocation7 + $0x2c] sm:$0xf]
    %v156 = vld [vmem:[#allocation7 + $0x30] sm:$0xf]
    %v157 = vld [vmem:[#allocation7 + $0x34] sm:$0xf]
    %v158 = vld [vmem:[#allocation7 + $0x38] sm:$0xf]
    %v159 = vld [vmem:[#allocation7 + $0x3c] sm:$0xf]
    %v160 = vld [vmem:[%s4] sm:$0x1]
    %v162 = vlaneseq
    %v163 = vshrl.u32 %v162, 7
    %v164 = vsub.s32 0, %v163
    %v165 = vrot.slane %v160, %v164
    %v183 = vunpack.c.l.b16 %v144
    %v184 = vunpack.c.l.b16 %v145
    %v185 = vunpack.c.l.b16 %v146
    %v186 = vunpack.c.l.b16 %v147
    %v187 = vunpack.c.l.b16 %v148
    %v188 = vunpack.c.l.b16 %v149
    %v189 = vunpack.c.l.b16 %v150
    %v190 = vunpack.c.l.b16 %v151
    %v191 = vunpack.c.l.b16 %v152
    %v192 = vunpack.c.l.b16 %v153
    %v193 = vunpack.c.l.b16 %v154
    %v194 = vunpack.c.l.b16 %v155
    %v195 = vunpack.c.l.b16 %v156
    %v196 = vunpack.c.l.b16 %v157
    %v197 = vunpack.c.l.b16 %v158
    %v198 = vunpack.c.l.b16 %v159
    %v199 = vpack.c.b16 %v184, %v183
    %v200 = vpack.c.b16 %v186, %v185
    %v201 = vpack.c.b16 %v188, %v187
    %v202 = vpack.c.b16 %v190, %v189
    %v203 = vpack.c.b16 %v192, %v191
    %v204 = vpack.c.b16 %v194, %v193
    %v205 = vpack.c.b16 %v196, %v195
    %v206 = vpack.c.b16 %v198, %v197
    %215 = vmatprep.subr.bf16.mxu0 0
    %216 = vmatpush1.bf16.msra.mxu0 %v199
    %217 = vmatprep.subr.bf16.mxu0 0
    %218 = vmatpush1.bf16.msra.mxu0 %v200
    %219 = vmatprep.subr.bf16.mxu0 0
    %220 = vmatpush1.bf16.msra.mxu0 %v201
    %221 = vmatprep.subr.bf16.mxu0 0
    %222 = vmatpush1.bf16.msra.mxu0 %v202
    %223 = vmatprep.subr.bf16.mxu0 0
    %224 = vmatpush1.bf16.msra.mxu0 %v203
    %225 = vmatprep.subr.bf16.mxu0 0
    %226 = vmatpush1.bf16.msra.mxu0 %v204
    %227 = vmatprep.subr.bf16.mxu0 0
    %228 = vmatpush1.bf16.msra.mxu0 %v205
    %229 = vmatprep.subr.bf16.mxu0 0
    %230 = vmatpush1.bf16.msra.mxu0 %v206
    %231 = vmatprep.subr.bf16.mxu0 0
    %232 = vmatpush1.bf16.msra.mxu0 0
    %233 = vmatprep.subr.bf16.mxu0 0
    %234 = vmatpush1.bf16.msra.mxu0 0
    %235 = vmatprep.subr.bf16.mxu0 0
    %236 = vmatpush1.bf16.msra.mxu0 0
    %237 = vmatprep.subr.bf16.mxu0 0
    %238 = vmatpush1.bf16.msra.mxu0 0
    %239 = vmatprep.subr.bf16.mxu0 0
    %240 = vmatpush1.bf16.msra.mxu0 0
    %241 = vmatprep.subr.bf16.mxu0 0
    %242 = vmatpush1.bf16.msra.mxu0 0
    %243 = vmatprep.subr.bf16.mxu0 0
    %244 = vmatpush1.bf16.msra.mxu0 0
    %245 = vmatprep.subr.bf16.mxu0 0
    %246 = vmatpush1.bf16.msra.mxu0 0
    %247 = vmatprep.mubr.bf16.mxu0 0
    %248 = vmatmul.mubr.bf16.gmra.mrb[0].mxu0 %v143
    %v249 = vpop.f32.mrb[0].mxu0
    %v250 = vadd.f32 %v165, %v249
    %v251 = vpop.f32.mrb[0].mxu0
    %v252 = vpop.f32.mrb[0].mxu0
    %v253 = vpop.f32.mrb[0].mxu0
    %254 = vdwg.mxu0
    %v255 = vmax.f32 %v250, 0.0
    %v256 = vpack.c.bf16 %v255, %v255
    %v257 = vld [vmem:[#allocation8] sm:$0xf]
    %v258 = vld [vmem:[#allocation8 + $0x4] sm:$0xf]
    %v259 = vld [vmem:[#allocation8 + $0x8] sm:$0xf]
    %v260 = vld [vmem:[#allocation8 + $0xc] sm:$0xf]
    %v261 = vld [vmem:[#allocation8 + $0x10] sm:$0xf]
    %v262 = vld [vmem:[#allocation8 + $0x14] sm:$0xf]
    %v263 = vld [vmem:[#allocation8 + $0x18] sm:$0xf]
    %v264 = vld [vmem:[#allocation8 + $0x1c] sm:$0xf]
    %v265 = vld [vmem:[#allocation8 + $0x20] sm:$0xf]
    %v266 = vld [vmem:[#allocation8 + $0x24] sm:$0xf]
    %v267 = vld [vmem:[#allocation8 + $0x28] sm:$0xf]
    %v268 = vld [vmem:[#allocation8 + $0x2c] sm:$0xf]
    %v269 = vld [vmem:[#allocation8 + $0x30] sm:$0xf]
    %v270 = vld [vmem:[#allocation8 + $0x34] sm:$0xf]
    %v271 = vld [vmem:[#allocation8 + $0x38] sm:$0xf]
    %v272 = vld [vmem:[#allocation8 + $0x3c] sm:$0xf]
    %v273 = vld [vmem:[%s6] sm:$0x1]
    %v275 = vlaneseq
    %v276 = vshrl.u32 %v275, 7
    %v277 = vsub.s32 0, %v276
    %v278 = vrot.slane %v273, %v277
    %v296 = vunpack.c.l.b16 %v257
    %v297 = vunpack.c.l.b16 %v258
    %v298 = vunpack.c.l.b16 %v259
    %v299 = vunpack.c.l.b16 %v260
    %v300 = vunpack.c.l.b16 %v261
    %v301 = vunpack.c.l.b16 %v262
    %v302 = vunpack.c.l.b16 %v263
    %v303 = vunpack.c.l.b16 %v264
    %v304 = vunpack.c.l.b16 %v265
    %v305 = vunpack.c.l.b16 %v266
    %v306 = vunpack.c.l.b16 %v267
    %v307 = vunpack.c.l.b16 %v268
    %v308 = vunpack.c.l.b16 %v269
    %v309 = vunpack.c.l.b16 %v270
    %v310 = vunpack.c.l.b16 %v271
    %v311 = vunpack.c.l.b16 %v272
    %v312 = vpack.c.b16 %v297, %v296
    %v313 = vpack.c.b16 %v299, %v298
    %v314 = vpack.c.b16 %v301, %v300
    %v315 = vpack.c.b16 %v303, %v302
    %v316 = vpack.c.b16 %v305, %v304
    %v317 = vpack.c.b16 %v307, %v306
    %v318 = vpack.c.b16 %v309, %v308
    %v319 = vpack.c.b16 %v311, %v310
    %328 = vmatprep.subr.bf16.mxu0 0
    %329 = vmatpush1.bf16.msra.mxu0 %v312
    %330 = vmatprep.subr.bf16.mxu0 0
    %331 = vmatpush1.bf16.msra.mxu0 %v313
    %332 = vmatprep.subr.bf16.mxu0 0
    %333 = vmatpush1.bf16.msra.mxu0 %v314
    %334 = vmatprep.subr.bf16.mxu0 0
    %335 = vmatpush1.bf16.msra.mxu0 %v315
    %336 = vmatprep.subr.bf16.mxu0 0
    %337 = vmatpush1.bf16.msra.mxu0 %v316
    %338 = vmatprep.subr.bf16.mxu0 0
    %339 = vmatpush1.bf16.msra.mxu0 %v317
    %340 = vmatprep.subr.bf16.mxu0 0
    %341 = vmatpush1.bf16.msra.mxu0 %v318
    %342 = vmatprep.subr.bf16.mxu0 0
    %343 = vmatpush1.bf16.msra.mxu0 %v319
    %344 = vmatprep.subr.bf16.mxu0 0
    %345 = vmatpush1.bf16.msra.mxu0 0
    %346 = vmatprep.subr.bf16.mxu0 0
    %347 = vmatpush1.bf16.msra.mxu0 0
    %348 = vmatprep.subr.bf16.mxu0 0
    %349 = vmatpush1.bf16.msra.mxu0 0
    %350 = vmatprep.subr.bf16.mxu0 0
    %351 = vmatpush1.bf16.msra.mxu0 0
    %352 = vmatprep.subr.bf16.mxu0 0
    %353 = vmatpush1.bf16.msra.mxu0 0
    %354 = vmatprep.subr.bf16.mxu0 0
    %355 = vmatpush1.bf16.msra.mxu0 0
    %356 = vmatprep.subr.bf16.mxu0 0
    %357 = vmatpush1.bf16.msra.mxu0 0
    %358 = vmatprep.subr.bf16.mxu0 0
    %359 = vmatpush1.bf16.msra.mxu0 0
    %360 = vmatprep.mubr.bf16.mxu0 0
    %361 = vmatmul.mubr.bf16.gmra.mrb[0].mxu0 %v256
    %v362 = vpop.f32.mrb[0].mxu0
    %v363 = vadd.f32 %v278, %v362
    %v364 = vpop.f32.mrb[0].mxu0
    %v365 = vpop.f32.mrb[0].mxu0
    %v366 = vpop.f32.mrb[0].mxu0
    %367 = vdwg.mxu0
    %v368 = vlaneseq
    %v369 = vand.u32 %v368, 127
    %vm370 = vcmp.ge.s32.totalorder %v369, 4
    %vm371 = vcmp.lt.s32.totalorder %v369, 8
    %vm372 = vmand %vm370, %vm371
    %v373 = vmax.f32 %v363, 1e-06
    %v374 = vmin.f32 %v373, 1.0
    %v375 = vsel %vm372, %v374, %v363
    %376 = vst [vmem:[#allocation10] sm:$0x3] %v375
    // Predicated region
    $region46: #{tpu_custom_call.1} parent=1 // pred_check
      _
    $region47: #{tpu_custom_call.1} parent=1 // pred_check_branch
      %378 = sbr.rel (0) target = $region49
    $region48: #{tpu_custom_call.1} parent=1 // pred_region
      %s380 = ssub.s32 32, 32
      %381 = vsyncadd [#allocation4], %s380
      %s383 = sshll.u32 [#allocation10], 4
      %s384 = int_to_ptr.vmem [resolvable:$true] %s383
      %386 = dma.vmem_to_hbm [thread:$0]  %s384, 32, %s7, [#allocation4]
    $region49: #{tpu_custom_call.1} parent=1 // pred_fallthru
      _
    // Predicated region
    $region50: #{tpu_custom_call.1} parent=1 // pred_check
      _
    $region51: #{tpu_custom_call.1} parent=1 // pred_check_branch
      %388 = sbr.rel (0) target = $region53
    $region52: #{tpu_custom_call.1} parent=1 // pred_region
      %389 = dma.done [#allocation4], 32
    $region53: #{tpu_custom_call.1} parent=1 // pred_fallthru
      _
    %390 = vsyncpa [#allocation3], 1
    %391 = vsyncpa [#allocation6], 1
    %392 = vsyncpa [#allocation9], 1
    %393 = vsyncpa [#allocation4], 1

</llo_original>
